<compile_context>
chip_gen: v6e
topology: v6e:2x2x1
jax: 0.10.0
libtpu: 0.0.40
codegen_flags: <defaults>
</compile_context>

<pallas_src>
import jax
import jax.numpy as jnp
from jax.experimental import pallas as pl
from jax.experimental.pallas import tpu as pltpu


def attention_kernel(x_ref, w_ref, o_ref):
    # x_ref: (TB, T, D) VMEM block of lstm_output (native dtype, no slab upcast)
    # w_ref: (1, 1, D)  VMEM block: nn.Linear(2H, 1).weight, lane-major
    # o_ref: (TB, D)    dense VMEM output block (context vectors)
    tb, t, d = x_ref.shape
    x = x_ref[...]                                       # (TB, T, D)
    w = w_ref[...]                                       # (1, 1, D)

    # scores[b, t] = sum_d x[b, t, d] * w[d]  (dense (TB, T); VPU multiply +
    # lane-axis reduction, f32 accumulation).  The scalar Linear bias is a
    # uniform shift of every score and is dropped (softmax shift-invariance).
    s = jnp.sum((x * w).astype(jnp.float32), axis=-1)            # (TB, T)

    # Numerically stable softmax over the time axis (PyTorch dim=1).
    m = jnp.max(s, axis=-1, keepdims=True)                       # (TB, 1)
    e = jnp.exp(s - m)                                           # (TB, T)
    denom = jnp.sum(e, axis=-1, keepdims=True)                   # (TB, 1)
    p = e / denom            # exact divide: HBM-bound kernel, VPU/EUP are idle

    # context[b, d] = sum_t p[b, t] * x[b, t, d]   (MXU, f32 accumulation).
    # The dummy q=1 dim is added/removed with leading-dim-only reshapes
    # (minor dim unchanged), then stored as a sublane-dense (TB, D) block.
    p3 = p.astype(x.dtype).reshape(tb, 1, t)                     # (TB, 1, T)
    ctx = jnp.einsum("bqk,bkd->bqd", p3, x,
                     preferred_element_type=jnp.float32)         # (TB, 1, D)
    o_ref[...] = ctx.reshape(tb, d).astype(o_ref.dtype)          # dense store


_MIN_GRID_STEPS = 8   # keep several steps in flight (>= 2 per TensorCore on v7x)


def _device_kind() -> str:
    try:
        return jax.devices()[0].device_kind.lower()
    except Exception:
        return ""


def attention_forward(lstm_output, weight, bias=None, *, block_batch=None):
    """lstm_output: [B, T, D], weight: [1, D] (nn.Linear(2H,1).weight), bias: [1].

    Returns the attention context [B, D].  `bias` is accepted for API parity
    with the PyTorch module but is mathematically a no-op (softmax over the
    time axis is shift-invariant), so it is not sent to the kernel.
    """
    del bias  # shift-invariance of softmax over T: cannot change the output
    B, T, D = lstm_output.shape
    itemsize = jnp.dtype(lstm_output.dtype).itemsize

    kind = _device_kind()
    is_v7 = ("v7" in kind) or ("7x" in kind)
    if is_v7:
        slab_bytes = 12 * 1024 * 1024      # ~8-16 MiB x-slab target (64 MiB VMEM)
        vmem_limit = 48 * 1024 * 1024
        batch_sem = pltpu.CORE_PARALLEL    # split the batch grid across both TCs
    else:
        slab_bytes = 16 * 1024 * 1024      # v5e/v6e: 128 MiB physical VMEM
        vmem_limit = 64 * 1024 * 1024
        batch_sem = "parallel"

    per_row = max(T * D * itemsize, 1)     # bytes of one (T, D) batch row
    if block_batch is None:
        tb_bytes = max(1, slab_bytes // per_row)        # rows per multi-MiB slab
        tb_steps = max(1, B // _MIN_GRID_STEPS)         # keep >= ~8 grid steps
        TB = max(1, min(tb_bytes, tb_steps, B))
    else:
        TB = max(1, min(int(block_batch), B))

    # Keep double-buffered x slabs inside the scoped-VMEM budget (~25% headroom
    # for the output block and metadata).
    budget_rows = max(1, int(0.75 * vmem_limit) // (2 * per_row))
    TB = min(TB, budget_rows)
    # Sublane-dense (TB, D) output block: TB must be a multiple of 8 or == B.
    if TB < B:
        TB = max(8, (TB // 8) * 8)
        if TB >= B:
            TB = B
    # TODO(synk): add a T-tiled online-softmax path for very long sequences
    # where a single (T, D) row approaches the per-buffer VMEM budget.

    w3 = jnp.asarray(weight).reshape(1, 1, D)   # lane-major weight, no transpose

    out = pl.pallas_call(
        attention_kernel,
        out_shape=jax.ShapeDtypeStruct((B, D), lstm_output.dtype),
        grid_spec=pltpu.PrefetchScalarGridSpec(
            num_scalar_prefetch=0,
            grid=(pl.cdiv(B, TB),),
            in_specs=[
                pl.BlockSpec((TB, T, D), lambda b: (b, 0, 0)),   # x slab
                pl.BlockSpec((1, 1, D), lambda b: (0, 0, 0)),    # Linear weight
            ],
            out_specs=pl.BlockSpec((TB, D), lambda b: (b, 0)),   # dense context
        ),
        compiler_params=pltpu.CompilerParams(
            dimension_semantics=(batch_sem,),
            vmem_limit_bytes=vmem_limit,
        ),
    )(lstm_output, w3)
    return out


def attention_reference(lstm_output, weight, bias):
    # Pure-JAX reference matching the PyTorch module (bias included on purpose
    # to validate that dropping it in the kernel is exact up to rounding).
    scores = jnp.einsum("btd,od->bto", lstm_output, weight) + bias   # [B, T, 1]
    weights = jax.nn.softmax(scores, axis=1)
    return jnp.sum(weights * lstm_output, axis=1)                    # [B, D]


if __name__ == "__main__":
    hidden_dim = 16
    B, T, D = 2, 8, hidden_dim * 2

    key = jax.random.PRNGKey(0)
    k_x, k_w, k_b = jax.random.split(key, 3)

    lstm_output = jax.random.normal(k_x, (B, T, D), dtype=jnp.float32)
    # nn.Linear(2H, 1): weight [1, 2H], bias [1]; deterministic uniform init.
    bound = 1.0 / jnp.sqrt(D)
    weight = jax.random.uniform(k_w, (1, D), minval=-bound, maxval=bound,
                                dtype=jnp.float32)
    bias = jax.random.uniform(k_b, (1,), minval=-bound, maxval=bound,
                              dtype=jnp.float32)

    out = attention_forward(lstm_output, weight, bias)
    out = jax.block_until_ready(out)

    ref = attention_reference(lstm_output, weight, bias)
    assert out.shape == (B, D)
    # Exact softmax division in the kernel -> tight tolerance.
    assert jnp.allclose(out, ref, atol=1e-4, rtol=1e-4), "mismatch vs reference"

    print("KERNEL_OK")
</pallas_src>

<mosaic_0001>
module attributes {stable_mosaic.version = 11 : i64} {
  func.func @attention_kernel(%arg0: i32, %arg1: memref<2x8x32xf32, #tpu.memory_space<vmem>>, %arg2: memref<1x1x32xf32, #tpu.memory_space<vmem>>, %arg3: memref<2x32xf32, #tpu.memory_space<vmem>>) attributes {dimension_semantics = [#tpu.dimension_semantics<parallel>], iteration_bounds = array<i64: 1>, scalar_prefetch = 0 : i64, scratch_operands = 0 : i64, tpu.core_type = #tpu.core_type<tc>, window_params = [{transform_indices = @transform_0, window_bounds = array<i64: 2, 8, 32>}, {pipeline_mode = #tpu.pipeline_mode<synchronous>, transform_indices = @transform_1, window_bounds = array<i64: 1, 1, 32>}, {transform_indices = @transform_2, window_bounds = array<i64: 2, 32>}]} {
    %c0 = arith.constant 0 : index
    %c0_0 = arith.constant 0 : index
    %c0_1 = arith.constant 0 : index
    %0 = vector.load %arg1[%c0, %c0_0, %c0_1] : memref<2x8x32xf32, #tpu.memory_space<vmem>>, vector<2x8x32xf32>
    %c0_2 = arith.constant 0 : index
    %c0_3 = arith.constant 0 : index
    %c0_4 = arith.constant 0 : index
    %1 = vector.load %arg2[%c0_2, %c0_3, %c0_4] : memref<1x1x32xf32, #tpu.memory_space<vmem>>, vector<1x1x32xf32>
    %2 = vector.broadcast %1 : vector<1x1x32xf32> to vector<2x8x32xf32>
    %3 = arith.mulf %0, %2 : vector<2x8x32xf32>
    %cst = arith.constant dense<0.000000e+00> : vector<2x8xf32>
    %4 = vector.multi_reduction <add>, %3, %cst [2] : vector<2x8x32xf32> to vector<2x8xf32>
    %cst_5 = arith.constant dense<0xFF800000> : vector<2xf32>
    %5 = vector.multi_reduction <maximumf>, %4, %cst_5 [1] : vector<2x8xf32> to vector<2xf32>
    %6 = vector.shape_cast %5 : vector<2xf32> to vector<2x1xf32>
    %7 = vector.broadcast %6 : vector<2x1xf32> to vector<2x8xf32>
    %8 = arith.subf %4, %7 : vector<2x8xf32>
    %9 = math.exp %8 : vector<2x8xf32>
    %cst_6 = arith.constant dense<0.000000e+00> : vector<2xf32>
    %10 = vector.multi_reduction <add>, %9, %cst_6 [1] : vector<2x8xf32> to vector<2xf32>
    %11 = vector.shape_cast %10 : vector<2xf32> to vector<2x1xf32>
    %12 = vector.broadcast %11 : vector<2x1xf32> to vector<2x8xf32>
    %13 = arith.divf %9, %12 : vector<2x8xf32>
    %14 = vector.shape_cast %13 : vector<2x8xf32> to vector<2x1x8xf32>
    "tpu.trace_start"() <{level = 10 : i32, message = "bqk,bkd->bqd"}> : () -> ()
    %cst_7 = arith.constant dense<0.000000e+00> : vector<2x1x32xf32>
    %15 = tpu.matmul %14, %0, %cst_7 {dimension_numbers = #tpu.dot_dimension_numbers<[2], [1], [1], [2], [0, 0, 0, 1, 1, 2], [0], [0]>} : vector<2x1x8xf32>, vector<2x8x32xf32>, vector<2x1x32xf32> -> vector<2x1x32xf32>
    "tpu.trace_stop"() : () -> ()
    %16 = vector.shape_cast %15 : vector<2x1x32xf32> to vector<2x32xf32>
    %c0_8 = arith.constant 0 : index
    %c0_9 = arith.constant 0 : index
    %17 = vector.load %arg3[%c0_8, %c0_9] : memref<2x32xf32, #tpu.memory_space<vmem>>, vector<2x32xf32>
    tpu.vector_store %arg3[%c0_8, %c0_9], %16 {strides = array<i32>} : memref<2x32xf32, #tpu.memory_space<vmem>>, vector<2x32xf32>,
    return
  }
  func.func @transform_0(%arg0: i32) -> (i32, i32, i32) {
    %c0_i32 = arith.constant 0 : i32
    %c0_i32_0 = arith.constant 0 : i32
    %c0_i32_1 = arith.constant 0 : i32
    return %arg0, %c0_i32, %c0_i32_0 : i32, i32, i32
  }
  func.func @transform_1(%arg0: i32) -> (i32, i32, i32) {
    %c0_i32 = arith.constant 0 : i32
    %c0_i32_0 = arith.constant 0 : i32
    %c0_i32_1 = arith.constant 0 : i32
    %c0_i32_2 = arith.constant 0 : i32
    return %c0_i32, %c0_i32_0, %c0_i32_1 : i32, i32, i32
  }
  func.func @transform_2(%arg0: i32) -> (i32, i32) {
    %c0_i32 = arith.constant 0 : i32
    %c0_i32_0 = arith.constant 0 : i32
    return %arg0, %c0_i32 : i32, i32
  }
}

</mosaic_0001>

<llo_original>
// kernel: tpu_custom_call.1
$region0: #{tpu_custom_call.1}
  #allocation0 [shape = 'u32[]', space=smem, size = 0x4, offset = 0x4, fixed_abs, tag = 'smem constant byte address 0x4 - core index']
  #allocation1 [shape = 'u32[144,128]{1,0:T(1,128)}', space=vmem, size = 0x12000, scoped, tag = 'internal scratch']
  %s0 = inlined_call_operand.hbm [shape: f32[2,8,32], index: 0, kind: input, shape index: {}]
  %s1 = inlined_call_operand.vmem [shape: f32[1,1,32], index: 1, kind: input, shape index: {}]
  %s2 = inlined_call_operand.hbm [shape: f32[2,32], index: 2, kind: output, shape index: {}]
  %s3 = sld [smem:[#allocation0]]
  $region22: #{tpu_custom_call.1} parent=0
    _
  %s5 = ssub.s32 1, %s3
  %s6 = scalar_select 0, %s5, %s3
  $region1: #{tpu_custom_call.1} parent=0
    #allocation2 [shape = 'u8[8192]{0}', space=vmem, size = 0x2000, scoped, tag = 'input window, operand 0, single buffered']
    #allocation3 [shape = 's32[1]{0}', space=sflag, size = 0x4, scoped, tag = 'scoped memory for tpu_custom_call.1']
    #allocation4 [shape = 's32[1]{0}', space=sflag, size = 0x4, scoped, tag = 'scoped memory for tpu_custom_call.1']
    #allocation5 [shape = 'u8[1024]{0}', space=vmem, size = 0x400, scoped, tag = 'output window, operand 0, single buffered']
    %7 = vsyncpa [#allocation3], 0
    %8 = vsyncpa [#allocation4], 0
    // Predicated region
    $region2: #{tpu_custom_call.1} parent=1 // pred_check
      _
    $region3: #{tpu_custom_call.1} parent=1 // pred_check_branch
      %10 = sbr.rel (0) target = $region5
    $region4: #{tpu_custom_call.1} parent=1 // pred_region
      %s12 = ssub.s32 256, 256
      %13 = vsyncadd [#allocation3], %s12
      %s14 = sshll.u32 [#allocation2], 4
      %s15 = int_to_ptr.vmem [resolvable:$true] %s14
      %20 = dma.hbm_to_vmem [thread:$0]  %s0, 256, %s15, [#allocation3], 128, 128, 8
    $region5: #{tpu_custom_call.1} parent=1 // pred_fallthru
      _
    // Predicated region
    $region6: #{tpu_custom_call.1} parent=1 // pred_check
      _
    $region7: #{tpu_custom_call.1} parent=1 // pred_check_branch
      %22 = sbr.rel (0) target = $region9
    $region8: #{tpu_custom_call.1} parent=1 // pred_region
      _
    $region9: #{tpu_custom_call.1} parent=1 // pred_fallthru
      _
    // Predicated region
    $region10: #{tpu_custom_call.1} parent=1 // pred_check
      _
    $region11: #{tpu_custom_call.1} parent=1 // pred_check_branch
      %24 = sbr.rel (0) target = $region13
    $region12: #{tpu_custom_call.1} parent=1 // pred_region
      %25 = dma.done [#allocation3], 256
    $region13: #{tpu_custom_call.1} parent=1 // pred_fallthru
      _
    %v26 = vld [vmem:[#allocation2] sm:$0xff]
    %v27 = vld [vmem:[#allocation2 + $0x8] sm:$0xff]
    %v28 = vld [vmem:[%s1] sm:$0x1]
    %v30 = vlaneseq
    %v31 = vshrl.u32 %v30, 7
    %v32 = vsub.s32 0, %v31
    %v33 = vrot.slane %v28, %v32
    %v35 = vmul.f32 %v26, %v33
    %v36 = vmul.f32 %v27, %v33
    %vm37 = vcmask 261120
    %v38 = vsel %vm37, %v35, 0.0
    %39 = vadd.xlane.f32.xlu0 %v38
    %v40 = vpop.xlane.xlu0 %39
    %v41 = vsel %vm37, %v36, 0.0
    %42 = vadd.xlane.f32.xlu0 %v41
    %v43 = vpop.xlane.xlu0 %42
    %v46 = vlaneseq
    %v47 = vand.u32 %v46, 127
    %v48 = vlaneseq
    %v49 = vshrl.u32 %v48, 7
    %v50 = vsub.s32 %v47, %v49
    %v51 = vrot.slane %v40, %v50
    %v52 = vlaneseq
    %v53 = vshrl.u32 %v52, 7
    %v54 = vsub.s32 %v47, %v53
    %v55 = vrot.slane %v43, %v54
    %vm56 = vcmask 1041409
    %v57 = vsel %vm56, %v55, %v51
    %vm59 = vcmask 58368
    %v60 = vsel %vm59, %v57, -inf
    %61 = vmax.xlane.f32.xlu0 %v60
    %v62 = vpop.xlane.xlu0 %61
    %v64 = vlaneseq
    %v65 = vshrl.u32 %v64, 7
    %v66 = vsub.s32 0, %v65
    %v67 = vrot.slane %v62, %v66
    %v68 = vlaneseq
    %v69 = vshrl.u32 %v68, 7
    %v70 = vsub.s32 1, %v69
    %v71 = vrot.slane %v62, %v70
    %v74 = vsub.f32 %v40, %v67
    %v75 = vsub.f32 %v43, %v71
    %v76 = vmul.f32 %v74, 1.442695
    %v77 = vpow.pop %v76
    %v78 = vmul.f32 %v75, 1.442695
    %v79 = vpow.pop %v78
    %82 = vset.pattern.permute.xlu0 0
    %83 = vperm.xlu0 %82, %v77
    %v84 = vpop.permute.xlu0 %83
    %85 = vset.pattern.permute.xlu0 0
    %86 = vperm.xlu0 %85, %v79
    %v87 = vpop.permute.xlu0 %86
    %v88 = vlaneseq
    %v89 = vshrl.u32 %v88, 7
    %v90 = vsub.s32 %v47, %v89
    %v91 = vrot.slane %v84, %v90
    %v92 = vlaneseq
    %v93 = vshrl.u32 %v92, 7
    %v94 = vsub.s32 %v47, %v93
    %v95 = vrot.slane %v87, %v94
    %v96 = vsel %vm56, %v95, %v91
    %v98 = vsel %vm59, %v96, 0.0
    %99 = vadd.xlane.f32.xlu0 %v98
    %v100 = vpop.xlane.xlu0 %99
    %v102 = vlaneseq
    %v103 = vshrl.u32 %v102, 7
    %v104 = vsub.s32 0, %v103
    %v105 = vrot.slane %v100, %v104
    %v106 = vlaneseq
    %v107 = vshrl.u32 %v106, 7
    %v108 = vsub.s32 1, %v107
    %v109 = vrot.slane %v100, %v108
    %v112 = vrcp.pop %v105
    %v113 = vmul.f32 %v77, %v112
    %v114 = vrcp.pop %v109
    %v115 = vmul.f32 %v79, %v114
    %117 = vset.pattern.permute.xlu0 0
    %118 = vperm.xlu0 %117, %v113
    %v119 = vpop.permute.xlu0 %118
    %v120 = vlaneseq
    %v121 = vshrl.u32 %v120, 7
    %v122 = vsub.s32 %v47, %v121
    %v123 = vrot.slane %v119, %v122
    %vm124 = vcmask 64512
    %v125 = vsel %vm124, %v123, 0
    %127 = vmatprep.subr.mxu0 0.0
    %128 = vmatpush1.msra.mxu0 0.0
    %129 = vmatprep.subr.mxu0 0.0
    %130 = vmatpush1.msra.mxu0 0.0
    %131 = vmatprep.subr.mxu0 0.0
    %132 = vmatpush1.msra.mxu0 0.0
    %133 = vmatprep.subr.mxu0 0.0
    %134 = vmatpush1.msra.mxu0 0.0
    %135 = vmatprep.subr.mxu0 0.0
    %136 = vmatpush1.msra.mxu0 0.0
    %137 = vmatprep.subr.mxu0 0.0
    %138 = vmatpush1.msra.mxu0 0.0
    %139 = vmatprep.subr.mxu0 0.0
    %140 = vmatpush1.msra.mxu0 0.0
    %141 = vmatprep.subr.mxu0 0.0
    %142 = vmatpush1.msra.mxu0 0.0
    %143 = vmatprep.subr.mxu0 0.0
    %144 = vmatpush1.msra.mxu0 0.0
    %145 = vmatprep.subr.mxu0 0.0
    %146 = vmatpush1.msra.mxu0 0.0
    %147 = vmatprep.subr.mxu0 0.0
    %148 = vmatpush1.msra.mxu0 0.0
    %149 = vmatprep.subr.mxu0 0.0
    %150 = vmatpush1.msra.mxu0 0.0
    %151 = vmatprep.subr.mxu0 0.0
    %152 = vmatpush1.msra.mxu0 0.0
    %153 = vmatprep.subr.mxu0 0.0
    %154 = vmatpush1.msra.mxu0 0.0
    %155 = vmatprep.subr.mxu0 0.0
    %156 = vmatpush1.msra.mxu0 0.0
    %157 = vmatprep.subr.mxu0 0.0
    %158 = vmatpush1.msra.mxu0 %v26
    %159 = vmatprep.subr.mxu0 0.0
    %160 = vmatpush2.msra.mxu0 0.0
    %161 = vmatprep.subr.mxu0 0.0
    %162 = vmatpush2.msra.mxu0 0.0
    %163 = vmatprep.subr.mxu0 0.0
    %164 = vmatpush2.msra.mxu0 0.0
    %165 = vmatprep.subr.mxu0 0.0
    %166 = vmatpush2.msra.mxu0 0.0
    %167 = vmatprep.subr.mxu0 0.0
    %168 = vmatpush2.msra.mxu0 0.0
    %169 = vmatprep.subr.mxu0 0.0
    %170 = vmatpush2.msra.mxu0 0.0
    %171 = vmatprep.subr.mxu0 0.0
    %172 = vmatpush2.msra.mxu0 0.0
    %173 = vmatprep.subr.mxu0 0.0
    %174 = vmatpush2.msra.mxu0 0.0
    %175 = vmatprep.subr.mxu0 0.0
    %176 = vmatpush2.msra.mxu0 0.0
    %177 = vmatprep.subr.mxu0 0.0
    %178 = vmatpush2.msra.mxu0 0.0
    %179 = vmatprep.subr.mxu0 0.0
    %180 = vmatpush2.msra.mxu0 0.0
    %181 = vmatprep.subr.mxu0 0.0
    %182 = vmatpush2.msra.mxu0 0.0
    %183 = vmatprep.subr.mxu0 0.0
    %184 = vmatpush2.msra.mxu0 0.0
    %185 = vmatprep.subr.mxu0 0.0
    %186 = vmatpush2.msra.mxu0 0.0
    %187 = vmatprep.subr.mxu0 0.0
    %188 = vmatpush2.msra.mxu0 0.0
    %189 = vmatprep.subr.mxu0 0.0
    %190 = vmatpush2.msra.mxu0 0.0
    %191 = vmatprep.mubr.f32.mxu0 0.0
    %192 = vmatmul.mubr.f32.gmra.mxu0 %v125
    %v193 = vpop.f32.mrf.mxu0
    %v194 = vadd.f32 0.0, %v193
    %v195 = vpop.f32.mrf.mxu0
    %196 = vdwg.mxu0
    %198 = vset.pattern.permute.xlu0 0
    %199 = vperm.xlu0 %198, %v115
    %v200 = vpop.permute.xlu0 %199
    %v201 = vlaneseq
    %v202 = vshrl.u32 %v201, 7
    %v203 = vsub.s32 %v47, %v202
    %v204 = vrot.slane %v200, %v203
    %v205 = vsel %vm124, %v204, 0
    %207 = vmatprep.subr.mxu0 0.0
    %208 = vmatpush1.msra.mxu0 0.0
    %209 = vmatprep.subr.mxu0 0.0
    %210 = vmatpush1.msra.mxu0 0.0
    %211 = vmatprep.subr.mxu0 0.0
    %212 = vmatpush1.msra.mxu0 0.0
    %213 = vmatprep.subr.mxu0 0.0
    %214 = vmatpush1.msra.mxu0 0.0
    %215 = vmatprep.subr.mxu0 0.0
    %216 = vmatpush1.msra.mxu0 0.0
    %217 = vmatprep.subr.mxu0 0.0
    %218 = vmatpush1.msra.mxu0 0.0
    %219 = vmatprep.subr.mxu0 0.0
    %220 = vmatpush1.msra.mxu0 0.0
    %221 = vmatprep.subr.mxu0 0.0
    %222 = vmatpush1.msra.mxu0 0.0
    %223 = vmatprep.subr.mxu0 0.0
    %224 = vmatpush1.msra.mxu0 0.0
    %225 = vmatprep.subr.mxu0 0.0
    %226 = vmatpush1.msra.mxu0 0.0
    %227 = vmatprep.subr.mxu0 0.0
    %228 = vmatpush1.msra.mxu0 0.0
    %229 = vmatprep.subr.mxu0 0.0
    %230 = vmatpush1.msra.mxu0 0.0
    %231 = vmatprep.subr.mxu0 0.0
    %232 = vmatpush1.msra.mxu0 0.0
    %233 = vmatprep.subr.mxu0 0.0
    %234 = vmatpush1.msra.mxu0 0.0
    %235 = vmatprep.subr.mxu0 0.0
    %236 = vmatpush1.msra.mxu0 0.0
    %237 = vmatprep.subr.mxu0 0.0
    %238 = vmatpush1.msra.mxu0 %v27
    %239 = vmatprep.subr.mxu0 0.0
    %240 = vmatpush2.msra.mxu0 0.0
    %241 = vmatprep.subr.mxu0 0.0
    %242 = vmatpush2.msra.mxu0 0.0
    %243 = vmatprep.subr.mxu0 0.0
    %244 = vmatpush2.msra.mxu0 0.0
    %245 = vmatprep.subr.mxu0 0.0
    %246 = vmatpush2.msra.mxu0 0.0
    %247 = vmatprep.subr.mxu0 0.0
    %248 = vmatpush2.msra.mxu0 0.0
    %249 = vmatprep.subr.mxu0 0.0
    %250 = vmatpush2.msra.mxu0 0.0
    %251 = vmatprep.subr.mxu0 0.0
    %252 = vmatpush2.msra.mxu0 0.0
    %253 = vmatprep.subr.mxu0 0.0
    %254 = vmatpush2.msra.mxu0 0.0
    %255 = vmatprep.subr.mxu0 0.0
    %256 = vmatpush2.msra.mxu0 0.0
    %257 = vmatprep.subr.mxu0 0.0
    %258 = vmatpush2.msra.mxu0 0.0
    %259 = vmatprep.subr.mxu0 0.0
    %260 = vmatpush2.msra.mxu0 0.0
    %261 = vmatprep.subr.mxu0 0.0
    %262 = vmatpush2.msra.mxu0 0.0
    %263 = vmatprep.subr.mxu0 0.0
    %264 = vmatpush2.msra.mxu0 0.0
    %265 = vmatprep.subr.mxu0 0.0
    %266 = vmatpush2.msra.mxu0 0.0
    %267 = vmatprep.subr.mxu0 0.0
    %268 = vmatpush2.msra.mxu0 0.0
    %269 = vmatprep.subr.mxu0 0.0
    %270 = vmatpush2.msra.mxu0 0.0
    %271 = vmatprep.mubr.f32.mxu0 0.0
    %272 = vmatmul.mubr.f32.gmra.mxu0 %v205
    %v273 = vpop.f32.mrf.mxu0
    %v274 = vadd.f32 0.0, %v273
    %v275 = vpop.f32.mrf.mxu0
    %276 = vdwg.mxu0
    %v279 = vrot.slane %v274, 7
    %v280 = vsel %vm56, %v279, %v194
    %vm282 = vcmask 254976
    %283 = vst.msk [vmem:[#allocation5] sm:$0x3] %vm282, %v280
    // Predicated region
    $region14: #{tpu_custom_call.1} parent=1 // pred_check
      _
    $region15: #{tpu_custom_call.1} parent=1 // pred_check_branch
      %285 = sbr.rel (0) target = $region17
    $region16: #{tpu_custom_call.1} parent=1 // pred_region
      %s287 = ssub.s32 32, 32
      %288 = vsyncadd [#allocation4], %s287
      %s290 = sshll.u32 [#allocation5], 4
      %s291 = int_to_ptr.vmem [resolvable:$true] %s290
      %293 = dma.vmem_to_hbm [thread:$0]  %s291, 32, %s2, [#allocation4]
    $region17: #{tpu_custom_call.1} parent=1 // pred_fallthru
      _
    // Predicated region
    $region18: #{tpu_custom_call.1} parent=1 // pred_check
      _
    $region19: #{tpu_custom_call.1} parent=1 // pred_check_branch
      %295 = sbr.rel (0) target = $region21
    $region20: #{tpu_custom_call.1} parent=1 // pred_region
      %296 = dma.done [#allocation4], 32
    $region21: #{tpu_custom_call.1} parent=1 // pred_fallthru
      _
    %297 = vsyncpa [#allocation3], 1
    %298 = vsyncpa [#allocation4], 1

</llo_original>
